<compile_context>
chip_gen: v7x
topology: tpu7x:2x2x1
jax: 0.10.0
libtpu: 0.0.40
codegen_flags: <defaults>
</compile_context>

<pallas_src>
import functools
import math

import jax
import jax.numpy as jnp
import numpy as np
from jax.experimental import pallas as pl
from jax.experimental.pallas import tpu as pltpu

HIDDEN = 128
_LANES = 128
_SMALL_D_MAX = 16          # <= this: fc1 stays on the VPU (MXU would be <4% used)
_MAX_TILE_SMALL_D = 4096   # batch-lane tile for the tiny-D path
_MAX_TILE_LARGE_D = 2048   # smaller batch tile for the MXU / K-tiled path
_K_TILE = 512              # contraction tile for the large-D MXU path


def _round_up(x, m):
    return (x + m - 1) // m * m


def _cdiv(a, b):
    return (a + b - 1) // b


# ---------------------------------------------------------------------------
# Kernels
# ---------------------------------------------------------------------------
def _critic_kernel_small_d(xt_ref, w1t_ref, b1c_ref, w2c_ref, b2_ref, o_ref):
    """Tiny in_dim path: fc1 as D broadcast FMAs in the transposed layout.

    xt : [D, TB]       state^T (D sublanes, batch lanes)
    w1t: [128, D]      fc1 weight (PyTorch fc1.weight layout: [out, in])
    b1c: [128, 1]      fc1 bias column
    w2c: [128, 1]      fc2 weight column
    b2 : [1]   (SMEM)  fc2 bias scalar
    o  : [1, TB]       values, batch in lanes (lane-dense)
    """
    d = xt_ref.shape[0]

    # h^T = w1^T @ x^T built as D broadcast multiply-adds:
    #   - w1t[:, k:k+1] ([128,1]) lane-broadcasts once per k (loop-invariant,
    #     16 XLU broadcasts per k, independent of TB),
    #   - xt[k:k+1, :]  ([1,TB]) sublane-broadcasts (cheap),
    # so no per-batch-vreg cross-lane broadcast is emitted.
    acc = w1t_ref[:, 0:1] * xt_ref[0:1, :]
    for k in range(1, d):                       # d is a static Python int
        acc = acc + w1t_ref[:, k:k + 1] * xt_ref[k:k + 1, :]

    h = jnp.maximum(acc + b1c_ref[...], 0.0)    # [128, TB]: bias + ReLU on VPU

    # fc2 (N=1): elementwise multiply by the w2 column, then reduce the 128
    # hidden sublanes (15 VPU vreg adds + log2(8) in-vreg sublane reduce per
    # lane group).  Result is already a lane-dense [1, TB] slab.
    vals = jnp.sum(h * w2c_ref[...], axis=0, keepdims=True)
    o_ref[...] = (vals + b2_ref[0]).astype(o_ref.dtype)


def _critic_kernel_mxu(xt_ref, w1t_ref, b1c_ref, w2c_ref, b2_ref, o_ref, acc_ref):
    """Large in_dim path: fc1 on the MXU, K-tiled over the contraction.

    grid = (num_batch_tiles, num_k_tiles); K is last ("arbitrary").
    xt : [TK, TB]   w1t: [128, TK]   acc: [128, TB] f32 scratch (resident).
    """
    k = pl.program_id(1)

    @pl.when(k == 0)
    def _():
        acc_ref[...] = jnp.zeros_like(acc_ref)

    # NOTE: default f32 MXU precision (bf16 passes) — fine for a value head,
    # not bit-identical to the VPU tiny-D path.
    acc_ref[...] += jnp.dot(w1t_ref[...], xt_ref[...],
                            preferred_element_type=jnp.float32)

    @pl.when(k == pl.num_programs(1) - 1)
    def _():
        h = jnp.maximum(acc_ref[...] + b1c_ref[...], 0.0)
        vals = jnp.sum(h * w2c_ref[...], axis=0, keepdims=True)
        o_ref[...] = (vals + b2_ref[0]).astype(o_ref.dtype)


# ---------------------------------------------------------------------------
# Wrappers
# ---------------------------------------------------------------------------
def _pick_batch_tile(b_rows, max_tile):
    """Largest tile that still gives >=2 grid steps for non-tiny batches.

    Keeps per-step overhead (~0.35us) amortized, while guaranteeing the
    "parallel" batch axis has work for both v7x TensorCores.
    """
    b128 = _round_up(max(b_rows, 1), _LANES)
    if b128 <= 2 * _LANES:
        return b128                                     # tiny batch: one tile
    return min(max_tile, _round_up(_cdiv(b128, 2), _LANES))


@jax.jit
def critic_forward_t(state_t, w1, b1, w2, b2):
    """Core implementation. state_t is the TRANSPOSED state, [in_dim, B].

    Producers that can hand the state over batch-in-lanes should call this
    directly and skip the transpose pass in `critic_forward`.
    Params: w1 [in_dim, 128], b1 [128], w2 [128, 1] (or [1, 128]), b2 [1].
    Returns [B, 1] f32.
    """
    D, B = state_t.shape
    assert w1.shape == (D, HIDDEN), "w1 must be [in_dim, 128]"
    small_d = D <= _SMALL_D_MAX

    TB = _pick_batch_tile(B, _MAX_TILE_SMALL_D if small_d else _MAX_TILE_LARGE_D)
    B_pad = _round_up(B, TB)

    xt = state_t.astype(jnp.float32)
    if B_pad != B:
        # Pad the dense transposed layout only (<= TB-1 extra columns); XLA
        # fuses this with whatever produced state_t — no lane-bloated copy.
        xt = jnp.pad(xt, ((0, 0), (0, B_pad - B)))

    w1t = w1.astype(jnp.float32).T                      # [128, D]
    b1c = b1.reshape(HIDDEN, 1).astype(jnp.float32)     # [128, 1]
    w2c = w2.reshape(HIDDEN, 1).astype(jnp.float32)     # [128, 1]
    b2s = b2.reshape(1).astype(jnp.float32)             # (1,) scalar -> SMEM

    n_bt = B_pad // TB

    if small_d:
        out = pl.pallas_call(
            _critic_kernel_small_d,
            out_shape=jax.ShapeDtypeStruct((1, B_pad), jnp.float32),
            grid_spec=pltpu.PrefetchScalarGridSpec(
                num_scalar_prefetch=0,
                grid=(n_bt,),
                in_specs=[
                    pl.BlockSpec((D, TB), lambda i: (0, i)),            # x^T streamed
                    pl.BlockSpec((HIDDEN, D), lambda i: (0, 0)),        # w1^T pinned
                    pl.BlockSpec((HIDDEN, 1), lambda i: (0, 0)),        # b1 pinned
                    pl.BlockSpec((HIDDEN, 1), lambda i: (0, 0)),        # w2 pinned
                    pl.BlockSpec(memory_space=pltpu.MemorySpace.SMEM),  # b2 scalar
                ],
                out_specs=pl.BlockSpec((1, TB), lambda i: (0, i)),      # lane-dense
            ),
            compiler_params=pltpu.CompilerParams(
                dimension_semantics=("parallel",)),
        )(xt, w1t, b1c, w2c, b2s)
    else:
        TK = min(_K_TILE, _round_up(D, _LANES))
        D_pad = _round_up(D, TK)
        if D_pad != D:
            xt = jnp.pad(xt, ((0, D_pad - D), (0, 0)))
            w1t = jnp.pad(w1t, ((0, 0), (0, D_pad - D)))
        n_kt = D_pad // TK
        # Explicit VMEM budget: 2x(TK*TB) x-buffers + 2x(128*TK) w1-buffers +
        # (128*TB) accumulator (f32) stays well under 32 MiB; raising the
        # limit also covers v5e's 16 MiB default scoped limit.
        out = pl.pallas_call(
            _critic_kernel_mxu,
            out_shape=jax.ShapeDtypeStruct((1, B_pad), jnp.float32),
            grid_spec=pltpu.PrefetchScalarGridSpec(
                num_scalar_prefetch=0,
                grid=(n_bt, n_kt),
                in_specs=[
                    pl.BlockSpec((TK, TB), lambda i, k: (k, i)),        # x^T
                    pl.BlockSpec((HIDDEN, TK), lambda i, k: (0, k)),    # w1^T
                    pl.BlockSpec((HIDDEN, 1), lambda i, k: (0, 0)),     # b1
                    pl.BlockSpec((HIDDEN, 1), lambda i, k: (0, 0)),     # w2
                    pl.BlockSpec(memory_space=pltpu.MemorySpace.SMEM),  # b2
                ],
                out_specs=pl.BlockSpec((1, TB), lambda i, k: (0, i)),
                scratch_shapes=[pltpu.VMEM((HIDDEN, TB), jnp.float32)],
            ),
            compiler_params=pltpu.CompilerParams(
                dimension_semantics=("parallel", "arbitrary"),
                vmem_limit_bytes=32 * 1024 * 1024),
        )(xt, w1t, b1c, w2c, b2s)

    # [1, B_pad] lane-dense slab -> [B, 1]; padded columns (garbage) sliced off.
    return out.reshape(B_pad, 1)[:B]


@jax.jit
def critic_forward(state, w1, b1, w2, b2):
    """PyTorch-parity entry point: state [B, in_dim] -> values [B, 1]."""
    # One dense transpose(+pad) pass over B*in_dim*4 bytes; ~16-32x cheaper
    # than letting the kernel DMA the lane-padded [B, in_dim] layout.
    return critic_forward_t(state.T, w1, b1, w2, b2)


# ---------------------------------------------------------------------------
# Params / reference / test
# ---------------------------------------------------------------------------
def init_params(key, in_dim):
    """PyTorch nn.Linear default init: U[-1/sqrt(fan_in), +1/sqrt(fan_in)]."""
    k1, k2, k3, k4 = jax.random.split(key, 4)
    bound1 = 1.0 / math.sqrt(in_dim)
    w1 = jax.random.uniform(k1, (in_dim, HIDDEN), jnp.float32, -bound1, bound1)
    b1 = jax.random.uniform(k2, (HIDDEN,), jnp.float32, -bound1, bound1)
    bound2 = 1.0 / math.sqrt(HIDDEN)
    w2 = jax.random.uniform(k3, (HIDDEN, 1), jnp.float32, -bound2, bound2)
    b2 = jax.random.uniform(k4, (1,), jnp.float32, -bound2, bound2)
    return w1, b1, w2, b2


def _reference_f64(state, w1, b1, w2, b2):
    s = np.asarray(state, np.float64)
    h = np.maximum(s @ np.asarray(w1, np.float64) + np.asarray(b1, np.float64), 0.0)
    return h @ np.asarray(w2, np.float64) + np.asarray(b2, np.float64)


if __name__ == "__main__":
    key = jax.random.PRNGKey(0)
    k_p, k_x1, k_x2, k_p3, k_x3 = jax.random.split(key, 5)

    # Case 1: CartPole-style tiny state, tiny batch (single padded tile, VPU path).
    B, D = 8, 4
    w1, b1, w2, b2 = init_params(k_p, D)
    state = jax.random.normal(k_x1, (B, D), jnp.float32)
    out = jax.block_until_ready(critic_forward(state, w1, b1, w2, b2))
    assert out.shape == (B, 1)
    np.testing.assert_allclose(np.asarray(out), _reference_f64(state, w1, b1, w2, b2),
                               atol=1e-4, rtol=1e-4)

    # Case 2: larger batch with padding (2 grid steps on the "parallel" axis).
    B2 = 2 * 1024 + 77
    state2 = jax.random.normal(k_x2, (B2, D), jnp.float32)
    out2 = jax.block_until_ready(critic_forward(state2, w1, b1, w2, b2))
    assert out2.shape == (B2, 1)
    np.testing.assert_allclose(np.asarray(out2), _reference_f64(state2, w1, b1, w2, b2),
                               atol=1e-4, rtol=1e-4)

    # Case 3: large in_dim fallback (MXU path, 2 K-tiles, 2 batch tiles).
    B3, D3 = 300, 600
    w1b, b1b, w2b, b2b = init_params(k_p3, D3)
    state3 = jax.random.normal(k_x3, (B3, D3), jnp.float32)
    out3 = jax.block_until_ready(critic_forward(state3, w1b, b1b, w2b, b2b))
    assert out3.shape == (B3, 1)
    # Default f32 MXU precision (bf16 passes) -> looser tolerance vs f64 ref.
    np.testing.assert_allclose(np.asarray(out3), _reference_f64(state3, w1b, b1b, w2b, b2b),
                               atol=2e-2, rtol=2e-2)

    print("KERNEL_OK")
</pallas_src>

<mosaic_0001>
module attributes {stable_mosaic.version = 11 : i64} {
  func.func @_critic_kernel_small_d(%arg0: i32, %arg1: memref<4x128xf32, #tpu.memory_space<vmem>>, %arg2: memref<128x4xf32, #tpu.memory_space<vmem>>, %arg3: memref<128x1xf32, #tpu.memory_space<vmem>>, %arg4: memref<128x1xf32, #tpu.memory_space<vmem>>, %arg5: memref<1xf32, #tpu.memory_space<smem>>, %arg6: memref<1x128xf32, #tpu.memory_space<vmem>>) attributes {dimension_semantics = [#tpu.dimension_semantics<parallel>], iteration_bounds = array<i64: 1>, scalar_prefetch = 0 : i64, scratch_operands = 0 : i64, tpu.core_type = #tpu.core_type<tc>, window_params = [{transform_indices = @transform_0, window_bounds = array<i64: 4, 128>}, {pipeline_mode = #tpu.pipeline_mode<synchronous>, transform_indices = @transform_1, window_bounds = array<i64: 128, 4>}, {pipeline_mode = #tpu.pipeline_mode<synchronous>, transform_indices = @transform_2, window_bounds = array<i64: 128, 1>}, {pipeline_mode = #tpu.pipeline_mode<synchronous>, transform_indices = @transform_3, window_bounds = array<i64: 128, 1>}, {transform_indices = @transform_4, window_bounds = array<i64: 1>}, {transform_indices = @transform_5, window_bounds = array<i64: 1, 128>}]} {
    %c0 = arith.constant 0 : index
    %c0_0 = arith.constant 0 : index
    %0 = vector.load %arg2[%c0, %c0_0] : memref<128x4xf32, #tpu.memory_space<vmem>>, vector<128x1xf32>
    %c0_1 = arith.constant 0 : index
    %c0_2 = arith.constant 0 : index
    %1 = vector.load %arg1[%c0_1, %c0_2] : memref<4x128xf32, #tpu.memory_space<vmem>>, vector<1x128xf32>
    %2 = vector.broadcast %0 : vector<128x1xf32> to vector<128x128xf32>
    %3 = vector.broadcast %1 : vector<1x128xf32> to vector<128x128xf32>
    %4 = arith.mulf %2, %3 : vector<128x128xf32>
    %c0_3 = arith.constant 0 : index
    %c1 = arith.constant 1 : index
    %5 = vector.load %arg2[%c0_3, %c1] : memref<128x4xf32, #tpu.memory_space<vmem>>, vector<128x1xf32>
    %c1_4 = arith.constant 1 : index
    %c0_5 = arith.constant 0 : index
    %6 = vector.load %arg1[%c1_4, %c0_5] : memref<4x128xf32, #tpu.memory_space<vmem>>, vector<1x128xf32>
    %7 = vector.broadcast %5 : vector<128x1xf32> to vector<128x128xf32>
    %8 = vector.broadcast %6 : vector<1x128xf32> to vector<128x128xf32>
    %9 = arith.mulf %7, %8 : vector<128x128xf32>
    %10 = arith.addf %4, %9 : vector<128x128xf32>
    %c0_6 = arith.constant 0 : index
    %c2 = arith.constant 2 : index
    %11 = vector.load %arg2[%c0_6, %c2] : memref<128x4xf32, #tpu.memory_space<vmem>>, vector<128x1xf32>
    %c2_7 = arith.constant 2 : index
    %c0_8 = arith.constant 0 : index
    %12 = vector.load %arg1[%c2_7, %c0_8] : memref<4x128xf32, #tpu.memory_space<vmem>>, vector<1x128xf32>
    %13 = vector.broadcast %11 : vector<128x1xf32> to vector<128x128xf32>
    %14 = vector.broadcast %12 : vector<1x128xf32> to vector<128x128xf32>
    %15 = arith.mulf %13, %14 : vector<128x128xf32>
    %16 = arith.addf %10, %15 : vector<128x128xf32>
    %c0_9 = arith.constant 0 : index
    %c3 = arith.constant 3 : index
    %17 = vector.load %arg2[%c0_9, %c3] : memref<128x4xf32, #tpu.memory_space<vmem>>, vector<128x1xf32>
    %c3_10 = arith.constant 3 : index
    %c0_11 = arith.constant 0 : index
    %18 = vector.load %arg1[%c3_10, %c0_11] : memref<4x128xf32, #tpu.memory_space<vmem>>, vector<1x128xf32>
    %19 = vector.broadcast %17 : vector<128x1xf32> to vector<128x128xf32>
    %20 = vector.broadcast %18 : vector<1x128xf32> to vector<128x128xf32>
    %21 = arith.mulf %19, %20 : vector<128x128xf32>
    %22 = arith.addf %16, %21 : vector<128x128xf32>
    %c0_12 = arith.constant 0 : index
    %c0_13 = arith.constant 0 : index
    %23 = vector.load %arg3[%c0_12, %c0_13] : memref<128x1xf32, #tpu.memory_space<vmem>>, vector<128x1xf32>
    %24 = vector.broadcast %23 : vector<128x1xf32> to vector<128x128xf32>
    %25 = arith.addf %22, %24 : vector<128x128xf32>
    %cst = arith.constant 0.000000e+00 : f32
    %26 = vector.broadcast %cst : f32 to vector<128x128xf32>
    %27 = arith.maximumf %25, %26 : vector<128x128xf32>
    %c0_14 = arith.constant 0 : index
    %c0_15 = arith.constant 0 : index
    %28 = vector.load %arg4[%c0_14, %c0_15] : memref<128x1xf32, #tpu.memory_space<vmem>>, vector<128x1xf32>
    %29 = vector.broadcast %28 : vector<128x1xf32> to vector<128x128xf32>
    %30 = arith.mulf %27, %29 : vector<128x128xf32>
    %cst_16 = arith.constant dense<0.000000e+00> : vector<128xf32>
    %31 = vector.multi_reduction <add>, %30, %cst_16 [0] : vector<128x128xf32> to vector<128xf32>
    %32 = vector.shape_cast %31 : vector<128xf32> to vector<1x128xf32>
    %c0_17 = arith.constant 0 : index
    %33 = memref.load %arg5[%c0_17] : memref<1xf32, #tpu.memory_space<smem>>
    %34 = vector.broadcast %33 : f32 to vector<1x128xf32>
    %35 = arith.addf %32, %34 : vector<1x128xf32>
    %c0_18 = arith.constant 0 : index
    %c0_19 = arith.constant 0 : index
    %36 = vector.load %arg6[%c0_18, %c0_19] : memref<1x128xf32, #tpu.memory_space<vmem>>, vector<1x128xf32>
    tpu.vector_store %arg6[%c0_18, %c0_19], %35 {strides = array<i32>} : memref<1x128xf32, #tpu.memory_space<vmem>>, vector<1x128xf32>,
    return
  }
  func.func @transform_0(%arg0: i32) -> (i32, i32) {
    %c0_i32 = arith.constant 0 : i32
    %c0_i32_0 = arith.constant 0 : i32
    return %c0_i32, %arg0 : i32, i32
  }
  func.func @transform_1(%arg0: i32) -> (i32, i32) {
    %c0_i32 = arith.constant 0 : i32
    %c0_i32_0 = arith.constant 0 : i32
    %c0_i32_1 = arith.constant 0 : i32
    return %c0_i32, %c0_i32_0 : i32, i32
  }
  func.func @transform_2(%arg0: i32) -> (i32, i32) {
    %c0_i32 = arith.constant 0 : i32
    %c0_i32_0 = arith.constant 0 : i32
    %c0_i32_1 = arith.constant 0 : i32
    return %c0_i32, %c0_i32_0 : i32, i32
  }
  func.func @transform_3(%arg0: i32) -> (i32, i32) {
    %c0_i32 = arith.constant 0 : i32
    %c0_i32_0 = arith.constant 0 : i32
    %c0_i32_1 = arith.constant 0 : i32
    return %c0_i32, %c0_i32_0 : i32, i32
  }
  func.func @transform_4(%arg0: i32) -> i32 {
    %c0_i32 = arith.constant 0 : i32
    %c0_i32_0 = arith.constant 0 : i32
    return %c0_i32 : i32
  }
  func.func @transform_5(%arg0: i32) -> (i32, i32) {
    %c0_i32 = arith.constant 0 : i32
    %c0_i32_0 = arith.constant 0 : i32
    return %c0_i32, %arg0 : i32, i32
  }
}

</mosaic_0001>

<llo_original>
// kernel: critic_forward_t.1
$region0: #{critic_forward_t.1}
  #allocation0 [shape = 'u32[]', space=smem, size = 0x4, offset = 0x4, fixed_abs, tag = 'smem constant byte address 0x4 - core index']
  #allocation1 [shape = 'u32[144,128]{1,0:T(1,128)}', space=vmem, size = 0x12000, scoped, tag = 'internal scratch']
  #allocation2 [shape = 'f32[1]{0:T(128)S(6)}', space=smem, size = 0x200, scoped, tag = 'scoped memory for critic_forward_t.1']
  %s0 = inlined_call_operand.vmem [shape: f32[4,128], index: 0, kind: input, shape index: {}]
  %s1 = inlined_call_operand.vmem [shape: f32[128,4], index: 1, kind: input, shape index: {}]
  %s2 = inlined_call_operand.vmem [shape: f32[128,1], index: 2, kind: input, shape index: {}]
  %s3 = inlined_call_operand.vmem [shape: f32[128,1], index: 3, kind: input, shape index: {}]
  %s4 = inlined_call_operand.<no memory space> [shape: f32[1], index: 4, kind: input, shape index: {}]
  %s5 = inlined_call_operand.vmem [shape: f32[1,128], index: 5, kind: output, shape index: {}]
  %s6 = sld [smem:[#allocation0]]
  $region30: #{critic_forward_t.1} parent=0
    _
  %s8 = ssub.s32 1, %s6
  %s9 = scalar_select 0, %s8, %s6
  %10 = sst [smem:[#allocation2]] %s4
  // Predicated region
  $region2: #{critic_forward_t.1} parent=0 // pred_check
    _
  $region3: #{critic_forward_t.1} parent=0 // pred_check_branch
    %12 = sbr.rel (0) target = $region5
  $region4: #{critic_forward_t.1} parent=0 // pred_region
    _
  $region5: #{critic_forward_t.1} parent=0 // pred_fallthru
    _
  // Predicated region
  $region6: #{critic_forward_t.1} parent=0 // pred_check
    _
  $region7: #{critic_forward_t.1} parent=0 // pred_check_branch
    %14 = sbr.rel (0) target = $region9
  $region8: #{critic_forward_t.1} parent=0 // pred_region
    _
  $region9: #{critic_forward_t.1} parent=0 // pred_fallthru
    _
  // Predicated region
  $region10: #{critic_forward_t.1} parent=0 // pred_check
    _
  $region11: #{critic_forward_t.1} parent=0 // pred_check_branch
    %16 = sbr.rel (0) target = $region13
  $region12: #{critic_forward_t.1} parent=0 // pred_region
    _
  $region13: #{critic_forward_t.1} parent=0 // pred_fallthru
    _
  // Predicated region
  $region14: #{critic_forward_t.1} parent=0 // pred_check
    _
  $region15: #{critic_forward_t.1} parent=0 // pred_check_branch
    %18 = sbr.rel (0) target = $region17
  $region16: #{critic_forward_t.1} parent=0 // pred_region
    _
  $region17: #{critic_forward_t.1} parent=0 // pred_fallthru
    _
  // Predicated region
  $region18: #{critic_forward_t.1} parent=0 // pred_check
    _
  $region19: #{critic_forward_t.1} parent=0 // pred_check_branch
    %20 = sbr.rel (0) target = $region21
  $region20: #{critic_forward_t.1} parent=0 // pred_region
    _
  $region21: #{critic_forward_t.1} parent=0 // pred_fallthru
    _
  %v21 = vld [vmem:[%s1] sm:$0xff]
  %v22 = vld [vmem:[%s1 + $0x8] sm:$0xff]
  %v23 = vld [vmem:[%s1 + $0x10] sm:$0xff]
  %v24 = vld [vmem:[%s1 + $0x18] sm:$0xff]
  %v25 = vld [vmem:[%s1 + $0x20] sm:$0xff]
  %v26 = vld [vmem:[%s1 + $0x28] sm:$0xff]
  %v27 = vld [vmem:[%s1 + $0x30] sm:$0xff]
  %v28 = vld [vmem:[%s1 + $0x38] sm:$0xff]
  %v29 = vld [vmem:[%s1 + $0x40] sm:$0xff]
  %v30 = vld [vmem:[%s1 + $0x48] sm:$0xff]
  %v31 = vld [vmem:[%s1 + $0x50] sm:$0xff]
  %v32 = vld [vmem:[%s1 + $0x58] sm:$0xff]
  %v33 = vld [vmem:[%s1 + $0x60] sm:$0xff]
  %v34 = vld [vmem:[%s1 + $0x68] sm:$0xff]
  %v35 = vld [vmem:[%s1 + $0x70] sm:$0xff]
  %v36 = vld [vmem:[%s1 + $0x78] sm:$0xff]
  %v37 = vld [vmem:[%s0] sm:$0x1]
  %39 = vset.pattern.permute.xlu0 0
  %40 = vperm.xlu0 %39, %v21
  %v41 = vpop.permute.xlu0 %40
  %44 = vset.pattern.permute.xlu0 0
  %45 = vperm.xlu0 %44, %v22
  %v46 = vpop.permute.xlu0 %45
  %49 = vset.pattern.permute.xlu0 0
  %50 = vperm.xlu0 %49, %v23
  %v51 = vpop.permute.xlu0 %50
  %54 = vset.pattern.permute.xlu0 0
  %55 = vperm.xlu0 %54, %v24
  %v56 = vpop.permute.xlu0 %55
  %59 = vset.pattern.permute.xlu0 0
  %60 = vperm.xlu0 %59, %v25
  %v61 = vpop.permute.xlu0 %60
  %64 = vset.pattern.permute.xlu0 0
  %65 = vperm.xlu0 %64, %v26
  %v66 = vpop.permute.xlu0 %65
  %69 = vset.pattern.permute.xlu0 0
  %70 = vperm.xlu0 %69, %v27
  %v71 = vpop.permute.xlu0 %70
  %74 = vset.pattern.permute.xlu0 0
  %75 = vperm.xlu0 %74, %v28
  %v76 = vpop.permute.xlu0 %75
  %79 = vset.pattern.permute.xlu0 0
  %80 = vperm.xlu0 %79, %v29
  %v81 = vpop.permute.xlu0 %80
  %84 = vset.pattern.permute.xlu0 0
  %85 = vperm.xlu0 %84, %v30
  %v86 = vpop.permute.xlu0 %85
  %89 = vset.pattern.permute.xlu0 0
  %90 = vperm.xlu0 %89, %v31
  %v91 = vpop.permute.xlu0 %90
  %94 = vset.pattern.permute.xlu0 0
  %95 = vperm.xlu0 %94, %v32
  %v96 = vpop.permute.xlu0 %95
  %99 = vset.pattern.permute.xlu0 0
  %100 = vperm.xlu0 %99, %v33
  %v101 = vpop.permute.xlu0 %100
  %104 = vset.pattern.permute.xlu0 0
  %105 = vperm.xlu0 %104, %v34
  %v106 = vpop.permute.xlu0 %105
  %109 = vset.pattern.permute.xlu0 0
  %110 = vperm.xlu0 %109, %v35
  %v111 = vpop.permute.xlu0 %110
  %114 = vset.pattern.permute.xlu0 0
  %115 = vperm.xlu0 %114, %v36
  %v116 = vpop.permute.xlu0 %115
  %v118 = vlaneseq
  %v119 = vshrl.u32 %v118, 7
  %v120 = vsub.s32 0, %v119
  %v121 = vrot.slane %v37, %v120
  %v122 = vmul.f32 %v41, %v121
  %v123 = vmul.f32 %v46, %v121
  %v124 = vmul.f32 %v51, %v121
  %v125 = vmul.f32 %v56, %v121
  %v126 = vmul.f32 %v61, %v121
  %v127 = vmul.f32 %v66, %v121
  %v128 = vmul.f32 %v71, %v121
  %v129 = vmul.f32 %v76, %v121
  %v130 = vmul.f32 %v81, %v121
  %v131 = vmul.f32 %v86, %v121
  %v132 = vmul.f32 %v91, %v121
  %v133 = vmul.f32 %v96, %v121
  %v134 = vmul.f32 %v101, %v121
  %v135 = vmul.f32 %v106, %v121
  %v136 = vmul.f32 %v111, %v121
  %v137 = vmul.f32 %v116, %v121
  %v138 = vld [vmem:[%s0 + $0x1] sm:$0x1]
  %139 = vset.pattern.permute.xlu0 1
  %140 = vperm.xlu0 %139, %v21
  %v141 = vpop.permute.xlu0 %140
  %143 = vset.pattern.permute.xlu0 1
  %144 = vperm.xlu0 %143, %v22
  %v145 = vpop.permute.xlu0 %144
  %147 = vset.pattern.permute.xlu0 1
  %148 = vperm.xlu0 %147, %v23
  %v149 = vpop.permute.xlu0 %148
  %151 = vset.pattern.permute.xlu0 1
  %152 = vperm.xlu0 %151, %v24
  %v153 = vpop.permute.xlu0 %152
  %155 = vset.pattern.permute.xlu0 1
  %156 = vperm.xlu0 %155, %v25
  %v157 = vpop.permute.xlu0 %156
  %159 = vset.pattern.permute.xlu0 1
  %160 = vperm.xlu0 %159, %v26
  %v161 = vpop.permute.xlu0 %160
  %163 = vset.pattern.permute.xlu0 1
  %164 = vperm.xlu0 %163, %v27
  %v165 = vpop.permute.xlu0 %164
  %167 = vset.pattern.permute.xlu0 1
  %168 = vperm.xlu0 %167, %v28
  %v169 = vpop.permute.xlu0 %168
  %171 = vset.pattern.permute.xlu0 1
  %172 = vperm.xlu0 %171, %v29
  %v173 = vpop.permute.xlu0 %172
  %175 = vset.pattern.permute.xlu0 1
  %176 = vperm.xlu0 %175, %v30
  %v177 = vpop.permute.xlu0 %176
  %179 = vset.pattern.permute.xlu0 1
  %180 = vperm.xlu0 %179, %v31
  %v181 = vpop.permute.xlu0 %180
  %183 = vset.pattern.permute.xlu0 1
  %184 = vperm.xlu0 %183, %v32
  %v185 = vpop.permute.xlu0 %184
  %187 = vset.pattern.permute.xlu0 1
  %188 = vperm.xlu0 %187, %v33
  %v189 = vpop.permute.xlu0 %188
  %191 = vset.pattern.permute.xlu0 1
  %192 = vperm.xlu0 %191, %v34
  %v193 = vpop.permute.xlu0 %192
  %195 = vset.pattern.permute.xlu0 1
  %196 = vperm.xlu0 %195, %v35
  %v197 = vpop.permute.xlu0 %196
  %199 = vset.pattern.permute.xlu0 1
  %200 = vperm.xlu0 %199, %v36
  %v201 = vpop.permute.xlu0 %200
  %v203 = vlaneseq
  %v204 = vshrl.u32 %v203, 7
  %v205 = vsub.s32 0, %v204
  %v206 = vrot.slane %v138, %v205
  %v207 = vmul.f32 %v141, %v206
  %v208 = vmul.f32 %v145, %v206
  %v209 = vmul.f32 %v149, %v206
  %v210 = vmul.f32 %v153, %v206
  %v211 = vmul.f32 %v157, %v206
  %v212 = vmul.f32 %v161, %v206
  %v213 = vmul.f32 %v165, %v206
  %v214 = vmul.f32 %v169, %v206
  %v215 = vmul.f32 %v173, %v206
  %v216 = vmul.f32 %v177, %v206
  %v217 = vmul.f32 %v181, %v206
  %v218 = vmul.f32 %v185, %v206
  %v219 = vmul.f32 %v189, %v206
  %v220 = vmul.f32 %v193, %v206
  %v221 = vmul.f32 %v197, %v206
  %v222 = vmul.f32 %v201, %v206
  %v223 = vadd.f32 %v122, %v207
  %v224 = vadd.f32 %v123, %v208
  %v225 = vadd.f32 %v124, %v209
  %v226 = vadd.f32 %v125, %v210
  %v227 = vadd.f32 %v126, %v211
  %v228 = vadd.f32 %v127, %v212
  %v229 = vadd.f32 %v128, %v213
  %v230 = vadd.f32 %v129, %v214
  %v231 = vadd.f32 %v130, %v215
  %v232 = vadd.f32 %v131, %v216
  %v233 = vadd.f32 %v132, %v217
  %v234 = vadd.f32 %v133, %v218
  %v235 = vadd.f32 %v134, %v219
  %v236 = vadd.f32 %v135, %v220
  %v237 = vadd.f32 %v136, %v221
  %v238 = vadd.f32 %v137, %v222
  %v239 = vld [vmem:[%s0 + $0x2] sm:$0x1]
  %240 = vset.pattern.permute.xlu0 2
  %241 = vperm.xlu0 %240, %v21
  %v242 = vpop.permute.xlu0 %241
  %244 = vset.pattern.permute.xlu0 2
  %245 = vperm.xlu0 %244, %v22
  %v246 = vpop.permute.xlu0 %245
  %248 = vset.pattern.permute.xlu0 2
  %249 = vperm.xlu0 %248, %v23
  %v250 = vpop.permute.xlu0 %249
  %252 = vset.pattern.permute.xlu0 2
  %253 = vperm.xlu0 %252, %v24
  %v254 = vpop.permute.xlu0 %253
  %256 = vset.pattern.permute.xlu0 2
  %257 = vperm.xlu0 %256, %v25
  %v258 = vpop.permute.xlu0 %257
  %260 = vset.pattern.permute.xlu0 2
  %261 = vperm.xlu0 %260, %v26
  %v262 = vpop.permute.xlu0 %261
  %264 = vset.pattern.permute.xlu0 2
  %265 = vperm.xlu0 %264, %v27
  %v266 = vpop.permute.xlu0 %265
  %268 = vset.pattern.permute.xlu0 2
  %269 = vperm.xlu0 %268, %v28
  %v270 = vpop.permute.xlu0 %269
  %272 = vset.pattern.permute.xlu0 2
  %273 = vperm.xlu0 %272, %v29
  %v274 = vpop.permute.xlu0 %273
  %276 = vset.pattern.permute.xlu0 2
  %277 = vperm.xlu0 %276, %v30
  %v278 = vpop.permute.xlu0 %277
  %280 = vset.pattern.permute.xlu0 2
  %281 = vperm.xlu0 %280, %v31
  %v282 = vpop.permute.xlu0 %281
  %284 = vset.pattern.permute.xlu0 2
  %285 = vperm.xlu0 %284, %v32
  %v286 = vpop.permute.xlu0 %285
  %288 = vset.pattern.permute.xlu0 2
  %289 = vperm.xlu0 %288, %v33
  %v290 = vpop.permute.xlu0 %289
  %292 = vset.pattern.permute.xlu0 2
  %293 = vperm.xlu0 %292, %v34
  %v294 = vpop.permute.xlu0 %293
  %296 = vset.pattern.permute.xlu0 2
  %297 = vperm.xlu0 %296, %v35
  %v298 = vpop.permute.xlu0 %297
  %300 = vset.pattern.permute.xlu0 2
  %301 = vperm.xlu0 %300, %v36
  %v302 = vpop.permute.xlu0 %301
  %v304 = vlaneseq
  %v305 = vshrl.u32 %v304, 7
  %v306 = vsub.s32 0, %v305
  %v307 = vrot.slane %v239, %v306
  %v308 = vmul.f32 %v242, %v307
  %v309 = vmul.f32 %v246, %v307
  %v310 = vmul.f32 %v250, %v307
  %v311 = vmul.f32 %v254, %v307
  %v312 = vmul.f32 %v258, %v307
  %v313 = vmul.f32 %v262, %v307
  %v314 = vmul.f32 %v266, %v307
  %v315 = vmul.f32 %v270, %v307
  %v316 = vmul.f32 %v274, %v307
  %v317 = vmul.f32 %v278, %v307
  %v318 = vmul.f32 %v282, %v307
  %v319 = vmul.f32 %v286, %v307
  %v320 = vmul.f32 %v290, %v307
  %v321 = vmul.f32 %v294, %v307
  %v322 = vmul.f32 %v298, %v307
  %v323 = vmul.f32 %v302, %v307
  %v324 = vadd.f32 %v223, %v308
  %v325 = vadd.f32 %v224, %v309
  %v326 = vadd.f32 %v225, %v310
  %v327 = vadd.f32 %v226, %v311
  %v328 = vadd.f32 %v227, %v312
  %v329 = vadd.f32 %v228, %v313
  %v330 = vadd.f32 %v229, %v314
  %v331 = vadd.f32 %v230, %v315
  %v332 = vadd.f32 %v231, %v316
  %v333 = vadd.f32 %v232, %v317
  %v334 = vadd.f32 %v233, %v318
  %v335 = vadd.f32 %v234, %v319
  %v336 = vadd.f32 %v235, %v320
  %v337 = vadd.f32 %v236, %v321
  %v338 = vadd.f32 %v237, %v322
  %v339 = vadd.f32 %v238, %v323
  %v340 = vld [vmem:[%s0 + $0x3] sm:$0x1]
  %341 = vset.pattern.permute.xlu0 3
  %342 = vperm.xlu0 %341, %v21
  %v343 = vpop.permute.xlu0 %342
  %345 = vset.pattern.permute.xlu0 3
  %346 = vperm.xlu0 %345, %v22
  %v347 = vpop.permute.xlu0 %346
  %349 = vset.pattern.permute.xlu0 3
  %350 = vperm.xlu0 %349, %v23
  %v351 = vpop.permute.xlu0 %350
  %353 = vset.pattern.permute.xlu0 3
  %354 = vperm.xlu0 %353, %v24
  %v355 = vpop.permute.xlu0 %354
  %357 = vset.pattern.permute.xlu0 3
  %358 = vperm.xlu0 %357, %v25
  %v359 = vpop.permute.xlu0 %358
  %361 = vset.pattern.permute.xlu0 3
  %362 = vperm.xlu0 %361, %v26
  %v363 = vpop.permute.xlu0 %362
  %365 = vset.pattern.permute.xlu0 3
  %366 = vperm.xlu0 %365, %v27
  %v367 = vpop.permute.xlu0 %366
  %369 = vset.pattern.permute.xlu0 3
  %370 = vperm.xlu0 %369, %v28
  %v371 = vpop.permute.xlu0 %370
  %373 = vset.pattern.permute.xlu0 3
  %374 = vperm.xlu0 %373, %v29
  %v375 = vpop.permute.xlu0 %374
  %377 = vset.pattern.permute.xlu0 3
  %378 = vperm.xlu0 %377, %v30
  %v379 = vpop.permute.xlu0 %378
  %381 = vset.pattern.permute.xlu0 3
  %382 = vperm.xlu0 %381, %v31
  %v383 = vpop.permute.xlu0 %382
  %385 = vset.pattern.permute.xlu0 3
  %386 = vperm.xlu0 %385, %v32
  %v387 = vpop.permute.xlu0 %386
  %389 = vset.pattern.permute.xlu0 3
  %390 = vperm.xlu0 %389, %v33
  %v391 = vpop.permute.xlu0 %390
  %393 = vset.pattern.permute.xlu0 3
  %394 = vperm.xlu0 %393, %v34
  %v395 = vpop.permute.xlu0 %394
  %397 = vset.pattern.permute.xlu0 3
  %398 = vperm.xlu0 %397, %v35
  %v399 = vpop.permute.xlu0 %398
  %401 = vset.pattern.permute.xlu0 3
  %402 = vperm.xlu0 %401, %v36
  %v403 = vpop.permute.xlu0 %402
  %v405 = vlaneseq
  %v406 = vshrl.u32 %v405, 7
  %v407 = vsub.s32 0, %v406
  %v408 = vrot.slane %v340, %v407
  %v409 = vmul.f32 %v343, %v408
  %v410 = vmul.f32 %v347, %v408
  %v411 = vmul.f32 %v351, %v408
  %v412 = vmul.f32 %v355, %v408
  %v413 = vmul.f32 %v359, %v408
  %v414 = vmul.f32 %v363, %v408
  %v415 = vmul.f32 %v367, %v408
  %v416 = vmul.f32 %v371, %v408
  %v417 = vmul.f32 %v375, %v408
  %v418 = vmul.f32 %v379, %v408
  %v419 = vmul.f32 %v383, %v408
  %v420 = vmul.f32 %v387, %v408
  %v421 = vmul.f32 %v391, %v408
  %v422 = vmul.f32 %v395, %v408
  %v423 = vmul.f32 %v399, %v408
  %v424 = vmul.f32 %v403, %v408
  %v425 = vadd.f32 %v324, %v409
  %v426 = vadd.f32 %v325, %v410
  %v427 = vadd.f32 %v326, %v411
  %v428 = vadd.f32 %v327, %v412
  %v429 = vadd.f32 %v328, %v413
  %v430 = vadd.f32 %v329, %v414
  %v431 = vadd.f32 %v330, %v415
  %v432 = vadd.f32 %v331, %v416
  %v433 = vadd.f32 %v332, %v417
  %v434 = vadd.f32 %v333, %v418
  %v435 = vadd.f32 %v334, %v419
  %v436 = vadd.f32 %v335, %v420
  %v437 = vadd.f32 %v336, %v421
  %v438 = vadd.f32 %v337, %v422
  %v439 = vadd.f32 %v338, %v423
  %v440 = vadd.f32 %v339, %v424
  %v441 = vld [vmem:[%s2] sm:$0xff]
  %v442 = vld [vmem:[%s2 + $0x8] sm:$0xff]
  %v443 = vld [vmem:[%s2 + $0x10] sm:$0xff]
  %v444 = vld [vmem:[%s2 + $0x18] sm:$0xff]
  %v445 = vld [vmem:[%s2 + $0x20] sm:$0xff]
  %v446 = vld [vmem:[%s2 + $0x28] sm:$0xff]
  %v447 = vld [vmem:[%s2 + $0x30] sm:$0xff]
  %v448 = vld [vmem:[%s2 + $0x38] sm:$0xff]
  %v449 = vld [vmem:[%s2 + $0x40] sm:$0xff]
  %v450 = vld [vmem:[%s2 + $0x48] sm:$0xff]
  %v451 = vld [vmem:[%s2 + $0x50] sm:$0xff]
  %v452 = vld [vmem:[%s2 + $0x58] sm:$0xff]
  %v453 = vld [vmem:[%s2 + $0x60] sm:$0xff]
  %v454 = vld [vmem:[%s2 + $0x68] sm:$0xff]
  %v455 = vld [vmem:[%s2 + $0x70] sm:$0xff]
  %v456 = vld [vmem:[%s2 + $0x78] sm:$0xff]
  %458 = vset.pattern.permute.xlu0 0
  %459 = vperm.xlu0 %458, %v441
  %v460 = vpop.permute.xlu0 %459
  %463 = vset.pattern.permute.xlu0 0
  %464 = vperm.xlu0 %463, %v442
  %v465 = vpop.permute.xlu0 %464
  %468 = vset.pattern.permute.xlu0 0
  %469 = vperm.xlu0 %468, %v443
  %v470 = vpop.permute.xlu0 %469
  %473 = vset.pattern.permute.xlu0 0
  %474 = vperm.xlu0 %473, %v444
  %v475 = vpop.permute.xlu0 %474
  %478 = vset.pattern.permute.xlu0 0
  %479 = vperm.xlu0 %478, %v445
  %v480 = vpop.permute.xlu0 %479
  %483 = vset.pattern.permute.xlu0 0
  %484 = vperm.xlu0 %483, %v446
  %v485 = vpop.permute.xlu0 %484
  %488 = vset.pattern.permute.xlu0 0
  %489 = vperm.xlu0 %488, %v447
  %v490 = vpop.permute.xlu0 %489
  %493 = vset.pattern.permute.xlu0 0
  %494 = vperm.xlu0 %493, %v448
  %v495 = vpop.permute.xlu0 %494
  %498 = vset.pattern.permute.xlu0 0
  %499 = vperm.xlu0 %498, %v449
  %v500 = vpop.permute.xlu0 %499
  %503 = vset.pattern.permute.xlu0 0
  %504 = vperm.xlu0 %503, %v450
  %v505 = vpop.permute.xlu0 %504
  %508 = vset.pattern.permute.xlu0 0
  %509 = vperm.xlu0 %508, %v451
  %v510 = vpop.permute.xlu0 %509
  %513 = vset.pattern.permute.xlu0 0
  %514 = vperm.xlu0 %513, %v452
  %v515 = vpop.permute.xlu0 %514
  %518 = vset.pattern.permute.xlu0 0
  %519 = vperm.xlu0 %518, %v453
  %v520 = vpop.permute.xlu0 %519
  %523 = vset.pattern.permute.xlu0 0
  %524 = vperm.xlu0 %523, %v454
  %v525 = vpop.permute.xlu0 %524
  %528 = vset.pattern.permute.xlu0 0
  %529 = vperm.xlu0 %528, %v455
  %v530 = vpop.permute.xlu0 %529
  %533 = vset.pattern.permute.xlu0 0
  %534 = vperm.xlu0 %533, %v456
  %v535 = vpop.permute.xlu0 %534
  %v537 = vadd.f32 %v425, %v460
  %v538 = vadd.f32 %v426, %v465
  %v539 = vadd.f32 %v427, %v470
  %v540 = vadd.f32 %v428, %v475
  %v541 = vadd.f32 %v429, %v480
  %v542 = vadd.f32 %v430, %v485
  %v543 = vadd.f32 %v431, %v490
  %v544 = vadd.f32 %v432, %v495
  %v545 = vadd.f32 %v433, %v500
  %v546 = vadd.f32 %v434, %v505
  %v547 = vadd.f32 %v435, %v510
  %v548 = vadd.f32 %v436, %v515
  %v549 = vadd.f32 %v437, %v520
  %v550 = vadd.f32 %v438, %v525
  %v551 = vadd.f32 %v439, %v530
  %v552 = vadd.f32 %v440, %v535
  %v553 = vmax.f32 %v537, 0.0
  %v554 = vmax.f32 %v538, 0.0
  %v555 = vmax.f32 %v539, 0.0
  %v556 = vmax.f32 %v540, 0.0
  %v557 = vmax.f32 %v541, 0.0
  %v558 = vmax.f32 %v542, 0.0
  %v559 = vmax.f32 %v543, 0.0
  %v560 = vmax.f32 %v544, 0.0
  %v561 = vmax.f32 %v545, 0.0
  %v562 = vmax.f32 %v546, 0.0
  %v563 = vmax.f32 %v547, 0.0
  %v564 = vmax.f32 %v548, 0.0
  %v565 = vmax.f32 %v549, 0.0
  %v566 = vmax.f32 %v550, 0.0
  %v567 = vmax.f32 %v551, 0.0
  %v568 = vmax.f32 %v552, 0.0
  %v569 = vld [vmem:[%s3] sm:$0xff]
  %v570 = vld [vmem:[%s3 + $0x8] sm:$0xff]
  %v571 = vld [vmem:[%s3 + $0x10] sm:$0xff]
  %v572 = vld [vmem:[%s3 + $0x18] sm:$0xff]
  %v573 = vld [vmem:[%s3 + $0x20] sm:$0xff]
  %v574 = vld [vmem:[%s3 + $0x28] sm:$0xff]
  %v575 = vld [vmem:[%s3 + $0x30] sm:$0xff]
  %v576 = vld [vmem:[%s3 + $0x38] sm:$0xff]
  %v577 = vld [vmem:[%s3 + $0x40] sm:$0xff]
  %v578 = vld [vmem:[%s3 + $0x48] sm:$0xff]
  %v579 = vld [vmem:[%s3 + $0x50] sm:$0xff]
  %v580 = vld [vmem:[%s3 + $0x58] sm:$0xff]
  %v581 = vld [vmem:[%s3 + $0x60] sm:$0xff]
  %v582 = vld [vmem:[%s3 + $0x68] sm:$0xff]
  %v583 = vld [vmem:[%s3 + $0x70] sm:$0xff]
  %v584 = vld [vmem:[%s3 + $0x78] sm:$0xff]
  %586 = vset.pattern.permute.xlu0 0
  %587 = vperm.xlu0 %586, %v569
  %v588 = vpop.permute.xlu0 %587
  %591 = vset.pattern.permute.xlu0 0
  %592 = vperm.xlu0 %591, %v570
  %v593 = vpop.permute.xlu0 %592
  %596 = vset.pattern.permute.xlu0 0
  %597 = vperm.xlu0 %596, %v571
  %v598 = vpop.permute.xlu0 %597
  %601 = vset.pattern.permute.xlu0 0
  %602 = vperm.xlu0 %601, %v572
  %v603 = vpop.permute.xlu0 %602
  %606 = vset.pattern.permute.xlu0 0
  %607 = vperm.xlu0 %606, %v573
  %v608 = vpop.permute.xlu0 %607
  %611 = vset.pattern.permute.xlu0 0
  %612 = vperm.xlu0 %611, %v574
  %v613 = vpop.permute.xlu0 %612
  %616 = vset.pattern.permute.xlu0 0
  %617 = vperm.xlu0 %616, %v575
  %v618 = vpop.permute.xlu0 %617
  %621 = vset.pattern.permute.xlu0 0
  %622 = vperm.xlu0 %621, %v576
  %v623 = vpop.permute.xlu0 %622
  %626 = vset.pattern.permute.xlu0 0
  %627 = vperm.xlu0 %626, %v577
  %v628 = vpop.permute.xlu0 %627
  %631 = vset.pattern.permute.xlu0 0
  %632 = vperm.xlu0 %631, %v578
  %v633 = vpop.permute.xlu0 %632
  %636 = vset.pattern.permute.xlu0 0
  %637 = vperm.xlu0 %636, %v579
  %v638 = vpop.permute.xlu0 %637
  %641 = vset.pattern.permute.xlu0 0
  %642 = vperm.xlu0 %641, %v580
  %v643 = vpop.permute.xlu0 %642
  %646 = vset.pattern.permute.xlu0 0
  %647 = vperm.xlu0 %646, %v581
  %v648 = vpop.permute.xlu0 %647
  %651 = vset.pattern.permute.xlu0 0
  %652 = vperm.xlu0 %651, %v582
  %v653 = vpop.permute.xlu0 %652
  %656 = vset.pattern.permute.xlu0 0
  %657 = vperm.xlu0 %656, %v583
  %v658 = vpop.permute.xlu0 %657
  %661 = vset.pattern.permute.xlu0 0
  %662 = vperm.xlu0 %661, %v584
  %v663 = vpop.permute.xlu0 %662
  %v665 = vmul.f32 %v553, %v588
  %v666 = vmul.f32 %v554, %v593
  %v667 = vmul.f32 %v555, %v598
  %v668 = vmul.f32 %v556, %v603
  %v669 = vmul.f32 %v557, %v608
  %v670 = vmul.f32 %v558, %v613
  %v671 = vmul.f32 %v559, %v618
  %v672 = vmul.f32 %v560, %v623
  %v673 = vmul.f32 %v561, %v628
  %v674 = vmul.f32 %v562, %v633
  %v675 = vmul.f32 %v563, %v638
  %v676 = vmul.f32 %v564, %v643
  %v677 = vmul.f32 %v565, %v648
  %v678 = vmul.f32 %v566, %v653
  %v679 = vmul.f32 %v567, %v658
  %v680 = vmul.f32 %v568, %v663
  %v681 = vadd.f32 %v665, %v666
  %v682 = vadd.f32 %v681, %v667
  %v683 = vadd.f32 %v682, %v668
  %v684 = vadd.f32 %v683, %v669
  %v685 = vadd.f32 %v684, %v670
  %v686 = vadd.f32 %v685, %v671
  %v687 = vadd.f32 %v686, %v672
  %v688 = vadd.f32 %v687, %v673
  %v689 = vadd.f32 %v688, %v674
  %v690 = vadd.f32 %v689, %v675
  %v691 = vadd.f32 %v690, %v676
  %v692 = vadd.f32 %v691, %v677
  %v693 = vadd.f32 %v692, %v678
  %v694 = vadd.f32 %v693, %v679
  %v695 = vadd.f32 %v694, %v680
  %v696 = vrot.slane %v695, 4
  %v697 = vadd.f32 %v695, %v696
  %v698 = vrot.slane %v697, 2
  %v699 = vadd.f32 %v697, %v698
  %v700 = vrot.slane %v699, 1
  %v701 = vadd.f32 %v699, %v700
  %s702 = sld [smem:[#allocation2]]
  %v703 = vstv %s702
  %v704 = vadd.f32 %v701, %v703
  %705 = vst [vmem:[%s5] sm:$0x1] %v704
  // Predicated region
  $region22: #{critic_forward_t.1} parent=0 // pred_check
    _
  $region23: #{critic_forward_t.1} parent=0 // pred_check_branch
    %707 = sbr.rel (0) target = $region25
  $region24: #{critic_forward_t.1} parent=0 // pred_region
    _
  $region25: #{critic_forward_t.1} parent=0 // pred_fallthru
    _
  // Predicated region
  $region26: #{critic_forward_t.1} parent=0 // pred_check
    _
  $region27: #{critic_forward_t.1} parent=0 // pred_check_branch
    %709 = sbr.rel (0) target = $region29
  $region28: #{critic_forward_t.1} parent=0 // pred_region
    _
  $region29: #{critic_forward_t.1} parent=0 // pred_fallthru
    _

</llo_original>
